<compile_context>
chip_gen: v6e
topology: v6e:2x2x1
jax: 0.10.0
libtpu: 0.0.40
codegen_flags: <defaults>
</compile_context>

<pallas_src>
import functools

import jax
import jax.numpy as jnp
from jax import lax
from jax.experimental import pallas as pl
from jax.experimental.pallas import tpu as pltpu


def _seq_merging_kernel(params_ref, c_ref, v_ref, w_ref, out_ref,
                        a_carry, b_carry):
    # Block shapes:
    #   c_ref / v_ref / w_ref / out_ref : (Bb, Sc, D)
    #   params_ref                      : (4, D) rows = [dec_w, gamma, beta, dec_b]
    #   a_carry : (Bb, 1, 1)   b_carry : (Bb, 1, D)   -- recurrence state
    s_idx = pl.program_id(1)

    # Reset the carried (a, b) state at the first sequence chunk of each
    # batch block (sequence axis is "arbitrary" -> iterates in order per core).
    @pl.when(s_idx == 0)
    def _():
        a_carry[...] = jnp.zeros_like(a_carry)
        b_carry[...] = jnp.zeros_like(b_carry)

    Bb, Sc, D = c_ref.shape

    prm = params_ref[...]                          # single (4, D) load
    w_dec = prm[0:1, :].reshape(1, 1, D)
    gamma = prm[1:2, :].reshape(1, 1, D)
    beta = prm[2:3, :].reshape(1, 1, D)
    bias = prm[3:4, 0:1].reshape(1, 1, 1)

    C = c_ref[...]                                 # (Bb, Sc, D)
    V = v_ref[...]
    Wm = w_ref[...]

    # ---- vectorized per-step quantities (EUP / XLU, whole chunk at once) ----
    expC = jnp.exp(C)                                               # (Bb, Sc, D)
    P = expC * V                                                    # (Bb, Sc, D)
    u = jnp.sum(expC, axis=-1, keepdims=True)                       # (Bb, Sc, 1)
    z = jnp.sum(Wm * w_dec, axis=-1, keepdims=True) + bias          # (Bb, Sc, 1)
    # stable log(sigmoid(z))  (log-space cumulative decays; no underflow)
    logd = jnp.minimum(z, 0.0) - jnp.log(1.0 + jnp.exp(-jnp.abs(z)))  # (Bb, Sc, 1)

    # ---- chunkwise matmul scan on the MXU ----
    row = lax.broadcasted_iota(jnp.int32, (Sc, Sc), 0)
    col = lax.broadcasted_iota(jnp.int32, (Sc, Sc), 1)
    G = (col <= row).astype(jnp.float32)          # G[t,k] = 1 iff k <= t
    Hs = (row > col).astype(jnp.float32)          # Hs[k,s] = 1 iff k > s
    G_b = jnp.broadcast_to(G.reshape(1, Sc, Sc), (Bb, Sc, Sc))

    # S_mat[b,t,s] = sum_{s<k<=t} logd[b,k] = cum[t] - cum[s]  (0 for s > t)
    S_mat = jnp.einsum('btk,bks->bts', G_b, logd * Hs,
                       preferred_element_type=jnp.float32)          # (Bb, Sc, Sc)
    cum = jnp.einsum('btk,bks->bts', G_b, logd,
                     preferred_element_type=jnp.float32)            # (Bb, Sc, 1)

    # L[t,s] = prod_{s<k<=t} decay_k   (lower-triangular incl. diag, 0 above)
    L = jnp.exp(S_mat) * G_b                                        # (Bb, Sc, Sc)

    ba = jnp.einsum('bts,bsd->btd', L, P,
                    preferred_element_type=jnp.float32)             # (Bb, Sc, D)
    aa = jnp.einsum('bts,bsd->btd', L, u,
                    preferred_element_type=jnp.float32)             # (Bb, Sc, 1)

    dcum = jnp.exp(cum)                                             # (Bb, Sc, 1)
    b_all = ba + dcum * b_carry[...]                                # (Bb, Sc, D)
    a_all = aa + dcum * a_carry[...]                                # (Bb, Sc, 1)

    # carry the last timestep's state to the next sequence chunk
    b_carry[...] = b_all[:, Sc - 1:Sc, :]
    a_carry[...] = a_all[:, Sc - 1:Sc, :]

    # ---- vectorized epilogue: b/(a+eps) + LayerNorm, one large store ----
    out = b_all / (a_all + 1e-8)
    mean = jnp.mean(out, axis=-1, keepdims=True)
    cent = out - mean
    var = jnp.mean(cent * cent, axis=-1, keepdims=True)
    out_ref[...] = (cent * lax.rsqrt(var + 1e-5)) * gamma + beta


def _pick_s_chunk(S, max_chunk=256):
    """Largest sequence chunk <= max_chunk satisfying the (8,128) block rule."""
    if S <= max_chunk:
        return S
    for c in range(max_chunk, 7, -1):
        if S % c == 0 and c % 8 == 0:
            return c
    return S  # fall back: whole sequence in one block


def _pick_b_blk(B, max_blk=8):
    """Largest batch block <= max_blk; keep batch grid extent >= 2 if possible."""
    divs = [c for c in range(1, min(B, max_blk) + 1) if B % c == 0]
    pref = [c for c in divs if B // c >= 2]
    return max(pref) if pref else max(divs)


@functools.partial(jax.jit, static_argnames=("s_chunk", "b_blk"))
def sequence_merging_seq(C, V, W, dec_w, dec_b, gamma, beta, *,
                         s_chunk=None, b_blk=None):
    """C, V, W: (batch, seq, dim) float32.  Returns (batch, seq, dim) float32."""
    B, S, D = C.shape
    if s_chunk is None:
        s_chunk = _pick_s_chunk(S)
    if b_blk is None:
        b_blk = _pick_b_blk(B)
    assert S % s_chunk == 0, "sequence length must be divisible by s_chunk"
    assert B % b_blk == 0, "batch must be divisible by b_blk"
    n_s = S // s_chunk
    n_b = B // b_blk

    # Pack the tiny params into one VMEM tile: rows [dec_w, gamma, beta, bias].
    params = jnp.stack([
        dec_w.reshape(D).astype(jnp.float32),
        gamma.reshape(D).astype(jnp.float32),
        beta.reshape(D).astype(jnp.float32),
        jnp.broadcast_to(dec_b.reshape(-1)[0].astype(jnp.float32), (D,)),
    ], axis=0)                                              # (4, D)

    out = pl.pallas_call(
        _seq_merging_kernel,
        out_shape=jax.ShapeDtypeStruct((B, S, D), jnp.float32),
        grid_spec=pltpu.PrefetchScalarGridSpec(
            num_scalar_prefetch=0,
            grid=(n_b, n_s),
            in_specs=[
                pl.BlockSpec((4, D), lambda b, s: (0, 0)),                  # params
                pl.BlockSpec((b_blk, s_chunk, D), lambda b, s: (b, s, 0)),  # C
                pl.BlockSpec((b_blk, s_chunk, D), lambda b, s: (b, s, 0)),  # V
                pl.BlockSpec((b_blk, s_chunk, D), lambda b, s: (b, s, 0)),  # W
            ],
            out_specs=pl.BlockSpec((b_blk, s_chunk, D), lambda b, s: (b, s, 0)),
            scratch_shapes=[
                pltpu.VMEM((b_blk, 1, 1), jnp.float32),   # a carry
                pltpu.VMEM((b_blk, 1, D), jnp.float32),   # b carry
            ],
        ),
        compiler_params=pltpu.CompilerParams(
            dimension_semantics=("parallel", "arbitrary"),
            vmem_limit_bytes=48 * 1024 * 1024),
    )(params, C, V, W)
    return out


def _reference(C, V, W, dec_w, dec_b, gamma, beta):
    """Pure-JAX reference mirroring the PyTorch loop."""
    B, S, D = C.shape
    a = jnp.zeros((B, 1), jnp.float32)
    b = jnp.zeros((B, D), jnp.float32)
    w = dec_w.reshape(1, D)
    outs = []
    for t in range(S):
        C_t, V_t, W_t = C[:, t, :], V[:, t, :], W[:, t, :]
        decay = jax.nn.sigmoid(
            jnp.sum(W_t * w, axis=-1, keepdims=True) + dec_b.reshape(1, 1))
        expC = jnp.exp(C_t)
        a = decay * a + jnp.sum(expC, axis=-1, keepdims=True)
        b = decay * b + expC * V_t
        outs.append((b / (a + 1e-8))[:, None, :])
    res = jnp.concatenate(outs, axis=1)
    mean = jnp.mean(res, axis=-1, keepdims=True)
    var = jnp.mean((res - mean) ** 2, axis=-1, keepdims=True)
    return (res - mean) / jnp.sqrt(var + 1e-5) * gamma + beta


if __name__ == "__main__":
    embedding_dim = 80
    batch, seq_len = 2, 8

    key = jax.random.PRNGKey(0)
    kC, kV, kW, kw, kb = jax.random.split(key, 5)

    C = jax.random.normal(kC, (batch, seq_len, embedding_dim), jnp.float32)
    V = jax.random.normal(kV, (batch, seq_len, embedding_dim), jnp.float32)
    W = jax.random.normal(kW, (batch, seq_len, embedding_dim), jnp.float32)

    # decay_net: Linear(embedding_dim, 1); layer_norm affine with gamma=1, beta=0
    dec_w = jax.random.normal(kw, (1, embedding_dim), jnp.float32) * 0.1
    dec_b = jax.random.normal(kb, (1,), jnp.float32) * 0.1
    gamma = jnp.ones((embedding_dim,), jnp.float32)
    beta = jnp.zeros((embedding_dim,), jnp.float32)

    # Single-chunk path.
    out = sequence_merging_seq(C, V, W, dec_w, dec_b, gamma, beta)
    out = jax.block_until_ready(out)
    ref = _reference(C, V, W, dec_w, dec_b, gamma, beta)
    assert out.shape == (batch, seq_len, embedding_dim)
    assert jnp.allclose(out, ref, rtol=2e-4, atol=2e-4), "mismatch (single chunk)"

    # Multi-chunk path: exercises the carried (a, b) state across seq chunks.
    seq_len2 = 16
    kC2, kV2, kW2 = jax.random.split(jax.random.PRNGKey(1), 3)
    C2 = jax.random.normal(kC2, (batch, seq_len2, embedding_dim), jnp.float32)
    V2 = jax.random.normal(kV2, (batch, seq_len2, embedding_dim), jnp.float32)
    W2 = jax.random.normal(kW2, (batch, seq_len2, embedding_dim), jnp.float32)
    out2 = sequence_merging_seq(C2, V2, W2, dec_w, dec_b, gamma, beta, s_chunk=8)
    out2 = jax.block_until_ready(out2)
    ref2 = _reference(C2, V2, W2, dec_w, dec_b, gamma, beta)
    assert jnp.allclose(out2, ref2, rtol=2e-4, atol=2e-4), "mismatch (multi chunk)"

    print("KERNEL_OK")
</pallas_src>

<mosaic_0001>
module attributes {stable_mosaic.version = 11 : i64} {
  func.func @_seq_merging_kernel(%arg0: i32, %arg1: i32, %arg2: memref<4x80xf32, #tpu.memory_space<vmem>>, %arg3: memref<1x8x80xf32, #tpu.memory_space<vmem>>, %arg4: memref<1x8x80xf32, #tpu.memory_space<vmem>>, %arg5: memref<1x8x80xf32, #tpu.memory_space<vmem>>, %arg6: memref<1x8x80xf32, #tpu.memory_space<vmem>>, %arg7: memref<1x1x1xf32, #tpu.memory_space<vmem>>, %arg8: memref<1x1x80xf32, #tpu.memory_space<vmem>>) attributes {dimension_semantics = [#tpu.dimension_semantics<parallel>, #tpu.dimension_semantics<arbitrary>], iteration_bounds = array<i64: 2, 1>, scalar_prefetch = 0 : i64, scratch_operands = 2 : i64, tpu.core_type = #tpu.core_type<tc>, window_params = [{pipeline_mode = #tpu.pipeline_mode<synchronous>, transform_indices = @transform_0, window_bounds = array<i64: 4, 80>}, {transform_indices = @transform_1, window_bounds = array<i64: 1, 8, 80>}, {transform_indices = @transform_2, window_bounds = array<i64: 1, 8, 80>}, {transform_indices = @transform_3, window_bounds = array<i64: 1, 8, 80>}, {transform_indices = @transform_4, window_bounds = array<i64: 1, 8, 80>}]} {
    %c0_i32 = arith.constant 0 : i32
    %0 = arith.cmpi eq, %arg1, %c0_i32 : i32
    %1 = arith.extui %0 : i1 to i32
    %c0_i32_0 = arith.constant 0 : i32
    %2 = arith.cmpi ne, %1, %c0_i32_0 : i32
    scf.if %2 {
      %cst_40 = arith.constant 0.000000e+00 : f32
      %92 = vector.broadcast %cst_40 : f32 to vector<1x1x1xf32>
      %c0_41 = arith.constant 0 : index
      %c0_42 = arith.constant 0 : index
      %c0_43 = arith.constant 0 : index
      %93 = vector.load %arg7[%c0_41, %c0_42, %c0_43] : memref<1x1x1xf32, #tpu.memory_space<vmem>>, vector<1x1x1xf32>
      tpu.vector_store %arg7[%c0_41, %c0_42, %c0_43], %92 {strides = array<i32>} : memref<1x1x1xf32, #tpu.memory_space<vmem>>, vector<1x1x1xf32>,
      %cst_44 = arith.constant 0.000000e+00 : f32
      %94 = vector.broadcast %cst_44 : f32 to vector<1x1x80xf32>
      %c0_45 = arith.constant 0 : index
      %c0_46 = arith.constant 0 : index
      %c0_47 = arith.constant 0 : index
      %95 = vector.load %arg8[%c0_45, %c0_46, %c0_47] : memref<1x1x80xf32, #tpu.memory_space<vmem>>, vector<1x1x80xf32>
      tpu.vector_store %arg8[%c0_45, %c0_46, %c0_47], %94 {strides = array<i32>} : memref<1x1x80xf32, #tpu.memory_space<vmem>>, vector<1x1x80xf32>,
    } else {
    }
    %c0 = arith.constant 0 : index
    %c0_1 = arith.constant 0 : index
    %3 = vector.load %arg2[%c0, %c0_1] : memref<4x80xf32, #tpu.memory_space<vmem>>, vector<4x80xf32>
    %4 = vector.extract_strided_slice %3 {offsets = [0, 0], sizes = [1, 80], strides = [1, 1]} : vector<4x80xf32> to vector<1x80xf32>
    %5 = vector.shape_cast %4 : vector<1x80xf32> to vector<1x1x80xf32>
    %6 = vector.extract_strided_slice %3 {offsets = [1, 0], sizes = [1, 80], strides = [1, 1]} : vector<4x80xf32> to vector<1x80xf32>
    %7 = vector.shape_cast %6 : vector<1x80xf32> to vector<1x1x80xf32>
    %8 = vector.extract_strided_slice %3 {offsets = [2, 0], sizes = [1, 80], strides = [1, 1]} : vector<4x80xf32> to vector<1x80xf32>
    %9 = vector.shape_cast %8 : vector<1x80xf32> to vector<1x1x80xf32>
    %10 = vector.extract_strided_slice %3 {offsets = [3, 0], sizes = [1, 1], strides = [1, 1]} : vector<4x80xf32> to vector<1x1xf32>
    %11 = vector.shape_cast %10 : vector<1x1xf32> to vector<1x1x1xf32>
    %c0_2 = arith.constant 0 : index
    %c0_3 = arith.constant 0 : index
    %c0_4 = arith.constant 0 : index
    %12 = vector.load %arg3[%c0_2, %c0_3, %c0_4] : memref<1x8x80xf32, #tpu.memory_space<vmem>>, vector<1x8x80xf32>
    %c0_5 = arith.constant 0 : index
    %c0_6 = arith.constant 0 : index
    %c0_7 = arith.constant 0 : index
    %13 = vector.load %arg4[%c0_5, %c0_6, %c0_7] : memref<1x8x80xf32, #tpu.memory_space<vmem>>, vector<1x8x80xf32>
    %c0_8 = arith.constant 0 : index
    %c0_9 = arith.constant 0 : index
    %c0_10 = arith.constant 0 : index
    %14 = vector.load %arg5[%c0_8, %c0_9, %c0_10] : memref<1x8x80xf32, #tpu.memory_space<vmem>>, vector<1x8x80xf32>
    %15 = math.exp %12 : vector<1x8x80xf32>
    %16 = arith.mulf %15, %13 : vector<1x8x80xf32>
    %cst = arith.constant dense<0.000000e+00> : vector<1x8xf32>
    %17 = vector.multi_reduction <add>, %15, %cst [2] : vector<1x8x80xf32> to vector<1x8xf32>
    %18 = vector.shape_cast %17 : vector<1x8xf32> to vector<1x8x1xf32>
    %19 = vector.broadcast %5 : vector<1x1x80xf32> to vector<1x8x80xf32>
    %20 = arith.mulf %14, %19 : vector<1x8x80xf32>
    %cst_11 = arith.constant dense<0.000000e+00> : vector<1x8xf32>
    %21 = vector.multi_reduction <add>, %20, %cst_11 [2] : vector<1x8x80xf32> to vector<1x8xf32>
    %22 = vector.shape_cast %21 : vector<1x8xf32> to vector<1x8x1xf32>
    %23 = vector.broadcast %11 : vector<1x1x1xf32> to vector<1x8x1xf32>
    %24 = arith.addf %22, %23 : vector<1x8x1xf32>
    %cst_12 = arith.constant 0.000000e+00 : f32
    %25 = vector.broadcast %cst_12 : f32 to vector<1x8x1xf32>
    %26 = arith.minimumf %24, %25 : vector<1x8x1xf32>
    %27 = math.absf %24 : vector<1x8x1xf32>
    %cst_13 = arith.constant 0.000000e+00 : f32
    %28 = vector.broadcast %cst_13 : f32 to vector<1x8x1xf32>
    %29 = arith.subf %28, %27 : vector<1x8x1xf32>
    %30 = math.exp %29 : vector<1x8x1xf32>
    %cst_14 = arith.constant 1.000000e+00 : f32
    %31 = vector.broadcast %cst_14 : f32 to vector<1x8x1xf32>
    %32 = arith.addf %31, %30 : vector<1x8x1xf32>
    %33 = math.log %32 : vector<1x8x1xf32>
    %34 = arith.subf %26, %33 : vector<1x8x1xf32>
    %35 = tpu.iota {dimensions = array<i32: 0>} : vector<8x8xi32>
    %36 = tpu.iota {dimensions = array<i32: 1>} : vector<8x8xi32>
    %37 = arith.cmpi sle, %36, %35 : vector<8x8xi32>
    %38 = arith.extui %37 : vector<8x8xi1> to vector<8x8xi32>
    %39 = arith.sitofp %38 : vector<8x8xi32> to vector<8x8xf32>
    %40 = arith.cmpi sgt, %35, %36 : vector<8x8xi32>
    %41 = arith.extui %40 : vector<8x8xi1> to vector<8x8xi32>
    %42 = arith.sitofp %41 : vector<8x8xi32> to vector<8x8xf32>
    %43 = vector.shape_cast %39 : vector<8x8xf32> to vector<1x8x8xf32>
    %44 = vector.shape_cast %42 : vector<8x8xf32> to vector<1x8x8xf32>
    %45 = vector.broadcast %34 : vector<1x8x1xf32> to vector<1x8x8xf32>
    %46 = arith.mulf %45, %44 : vector<1x8x8xf32>
    "tpu.trace_start"() <{level = 10 : i32, message = "btk,bks->bts"}> : () -> ()
    %cst_15 = arith.constant dense<0.000000e+00> : vector<1x8x8xf32>
    %47 = tpu.matmul %43, %46, %cst_15 {dimension_numbers = #tpu.dot_dimension_numbers<[2], [1], [1], [2], [0, 0, 0, 1, 1, 2], [0], [0]>} : vector<1x8x8xf32>, vector<1x8x8xf32>, vector<1x8x8xf32> -> vector<1x8x8xf32>
    %cst_16 = arith.constant dense<0.000000e+00> : vector<1x8x1xf32>
    %48 = tpu.matmul %43, %34, %cst_16 {dimension_numbers = #tpu.dot_dimension_numbers<[2], [1], [1], [2], [0, 0, 0, 1, 1, 2], [0], [0]>} : vector<1x8x8xf32>, vector<1x8x1xf32>, vector<1x8x1xf32> -> vector<1x8x1xf32>
    "tpu.trace_stop"() : () -> ()
    %49 = math.exp %47 : vector<1x8x8xf32>
    %50 = arith.mulf %49, %43 : vector<1x8x8xf32>
    "tpu.trace_start"() <{level = 10 : i32, message = "bts,bsd->btd"}> : () -> ()
    %cst_17 = arith.constant dense<0.000000e+00> : vector<1x8x80xf32>
    %51 = tpu.matmul %50, %16, %cst_17 {dimension_numbers = #tpu.dot_dimension_numbers<[2], [1], [1], [2], [0, 0, 0, 1, 1, 2], [0], [0]>} : vector<1x8x8xf32>, vector<1x8x80xf32>, vector<1x8x80xf32> -> vector<1x8x80xf32>
    %cst_18 = arith.constant dense<0.000000e+00> : vector<1x8x1xf32>
    %52 = tpu.matmul %50, %18, %cst_18 {dimension_numbers = #tpu.dot_dimension_numbers<[2], [1], [1], [2], [0, 0, 0, 1, 1, 2], [0], [0]>} : vector<1x8x8xf32>, vector<1x8x1xf32>, vector<1x8x1xf32> -> vector<1x8x1xf32>
    "tpu.trace_stop"() : () -> ()
    %53 = math.exp %48 : vector<1x8x1xf32>
    %c0_19 = arith.constant 0 : index
    %c0_20 = arith.constant 0 : index
    %c0_21 = arith.constant 0 : index
    %54 = vector.load %arg8[%c0_19, %c0_20, %c0_21] : memref<1x1x80xf32, #tpu.memory_space<vmem>>, vector<1x1x80xf32>
    %55 = vector.broadcast %53 : vector<1x8x1xf32> to vector<1x8x80xf32>
    %56 = vector.broadcast %54 : vector<1x1x80xf32> to vector<1x8x80xf32>
    %57 = arith.mulf %55, %56 : vector<1x8x80xf32>
    %58 = arith.addf %51, %57 : vector<1x8x80xf32>
    %c0_22 = arith.constant 0 : index
    %c0_23 = arith.constant 0 : index
    %c0_24 = arith.constant 0 : index
    %59 = vector.load %arg7[%c0_22, %c0_23, %c0_24] : memref<1x1x1xf32, #tpu.memory_space<vmem>>, vector<1x1x1xf32>
    %60 = vector.broadcast %59 : vector<1x1x1xf32> to vector<1x8x1xf32>
    %61 = arith.mulf %53, %60 : vector<1x8x1xf32>
    %62 = arith.addf %52, %61 : vector<1x8x1xf32>
    %63 = vector.extract_strided_slice %58 {offsets = [0, 7, 0], sizes = [1, 1, 80], strides = [1, 1, 1]} : vector<1x8x80xf32> to vector<1x1x80xf32>
    %c0_25 = arith.constant 0 : index
    %c0_26 = arith.constant 0 : index
    %c0_27 = arith.constant 0 : index
    %64 = vector.load %arg8[%c0_25, %c0_26, %c0_27] : memref<1x1x80xf32, #tpu.memory_space<vmem>>, vector<1x1x80xf32>
    tpu.vector_store %arg8[%c0_25, %c0_26, %c0_27], %63 {strides = array<i32>} : memref<1x1x80xf32, #tpu.memory_space<vmem>>, vector<1x1x80xf32>,
    %65 = vector.extract_strided_slice %62 {offsets = [0, 7, 0], sizes = [1, 1, 1], strides = [1, 1, 1]} : vector<1x8x1xf32> to vector<1x1x1xf32>
    %c0_28 = arith.constant 0 : index
    %c0_29 = arith.constant 0 : index
    %c0_30 = arith.constant 0 : index
    %66 = vector.load %arg7[%c0_28, %c0_29, %c0_30] : memref<1x1x1xf32, #tpu.memory_space<vmem>>, vector<1x1x1xf32>
    tpu.vector_store %arg7[%c0_28, %c0_29, %c0_30], %65 {strides = array<i32>} : memref<1x1x1xf32, #tpu.memory_space<vmem>>, vector<1x1x1xf32>,
    %cst_31 = arith.constant 9.99999993E-9 : f32
    %67 = vector.broadcast %cst_31 : f32 to vector<1x8x1xf32>
    %68 = arith.addf %62, %67 : vector<1x8x1xf32>
    %69 = vector.broadcast %68 : vector<1x8x1xf32> to vector<1x8x80xf32>
    %70 = arith.divf %58, %69 : vector<1x8x80xf32>
    %cst_32 = arith.constant dense<0.000000e+00> : vector<1x8xf32>
    %71 = vector.multi_reduction <add>, %70, %cst_32 [2] : vector<1x8x80xf32> to vector<1x8xf32>
    %72 = vector.shape_cast %71 : vector<1x8xf32> to vector<1x8x1xf32>
    %cst_33 = arith.constant 8.000000e+01 : f32
    %73 = vector.broadcast %cst_33 : f32 to vector<1x8x1xf32>
    %74 = arith.divf %72, %73 : vector<1x8x1xf32>
    %75 = vector.broadcast %74 : vector<1x8x1xf32> to vector<1x8x80xf32>
    %76 = arith.subf %70, %75 : vector<1x8x80xf32>
    %77 = arith.mulf %76, %76 : vector<1x8x80xf32>
    %cst_34 = arith.constant dense<0.000000e+00> : vector<1x8xf32>
    %78 = vector.multi_reduction <add>, %77, %cst_34 [2] : vector<1x8x80xf32> to vector<1x8xf32>
    %79 = vector.shape_cast %78 : vector<1x8xf32> to vector<1x8x1xf32>
    %cst_35 = arith.constant 8.000000e+01 : f32
    %80 = vector.broadcast %cst_35 : f32 to vector<1x8x1xf32>
    %81 = arith.divf %79, %80 : vector<1x8x1xf32>
    %cst_36 = arith.constant 9.99999974E-6 : f32
    %82 = vector.broadcast %cst_36 : f32 to vector<1x8x1xf32>
    %83 = arith.addf %81, %82 : vector<1x8x1xf32>
    %84 = math.rsqrt %83 : vector<1x8x1xf32>
    %85 = vector.broadcast %84 : vector<1x8x1xf32> to vector<1x8x80xf32>
    %86 = arith.mulf %76, %85 : vector<1x8x80xf32>
    %87 = vector.broadcast %7 : vector<1x1x80xf32> to vector<1x8x80xf32>
    %88 = arith.mulf %86, %87 : vector<1x8x80xf32>
    %89 = vector.broadcast %9 : vector<1x1x80xf32> to vector<1x8x80xf32>
    %90 = arith.addf %88, %89 : vector<1x8x80xf32>
    %c0_37 = arith.constant 0 : index
    %c0_38 = arith.constant 0 : index
    %c0_39 = arith.constant 0 : index
    %91 = vector.load %arg6[%c0_37, %c0_38, %c0_39] : memref<1x8x80xf32, #tpu.memory_space<vmem>>, vector<1x8x80xf32>
    tpu.vector_store %arg6[%c0_37, %c0_38, %c0_39], %90 {strides = array<i32>} : memref<1x8x80xf32, #tpu.memory_space<vmem>>, vector<1x8x80xf32>,
    return
  }
  func.func @transform_0(%arg0: i32, %arg1: i32) -> (i32, i32) {
    %c0_i32 = arith.constant 0 : i32
    %c0_i32_0 = arith.constant 0 : i32
    %c0_i32_1 = arith.constant 0 : i32
    return %c0_i32, %c0_i32_0 : i32, i32
  }
  func.func @transform_1(%arg0: i32, %arg1: i32) -> (i32, i32, i32) {
    %c0_i32 = arith.constant 0 : i32
    %c0_i32_0 = arith.constant 0 : i32
    return %arg0, %arg1, %c0_i32 : i32, i32, i32
  }
  func.func @transform_2(%arg0: i32, %arg1: i32) -> (i32, i32, i32) {
    %c0_i32 = arith.constant 0 : i32
    %c0_i32_0 = arith.constant 0 : i32
    return %arg0, %arg1, %c0_i32 : i32, i32, i32
  }
  func.func @transform_3(%arg0: i32, %arg1: i32) -> (i32, i32, i32) {
    %c0_i32 = arith.constant 0 : i32
    %c0_i32_0 = arith.constant 0 : i32
    return %arg0, %arg1, %c0_i32 : i32, i32, i32
  }
  func.func @transform_4(%arg0: i32, %arg1: i32) -> (i32, i32, i32) {
    %c0_i32 = arith.constant 0 : i32
    %c0_i32_0 = arith.constant 0 : i32
    return %arg0, %arg1, %c0_i32 : i32, i32, i32
  }
}

</mosaic_0001>

<llo_original>
// kernel: sequence_merging_seq.1
$region0: #{sequence_merging_seq.1}
  #allocation0 [shape = 'u32[]', space=smem, size = 0x4, offset = 0x4, fixed_abs, tag = 'smem constant byte address 0x4 - core index']
  #allocation1 [shape = 'u32[144,128]{1,0:T(1,128)}', space=vmem, size = 0x12000, scoped, tag = 'internal scratch']
  #allocation2 [shape = 'f32[1,1,1]{2,1,0:T(1,128)}', space=vmem, size = 0x200, scoped, tag = 'scratch operand']
  #allocation3 [shape = 'f32[1,1,80]{2,1,0:T(1,128)}', space=vmem, size = 0x200, scoped, tag = 'scratch operand']
  %s0 = inlined_call_operand.vmem [shape: f32[4,80], index: 0, kind: input, shape index: {}]
  %s1 = inlined_call_operand.vmem [shape: f32[2,8,80], index: 1, kind: input, shape index: {}]
  %s2 = inlined_call_operand.hbm [shape: f32[2,8,80], index: 2, kind: input, shape index: {}]
  %s3 = inlined_call_operand.hbm [shape: f32[2,8,80], index: 3, kind: input, shape index: {}]
  %s4 = inlined_call_operand.hbm [shape: f32[2,8,80], index: 4, kind: output, shape index: {}]
  %s5 = sld [smem:[#allocation0]]
  $region61: #{sequence_merging_seq.1} parent=0
    _
  %s7 = ssub.s32 1, %s5
  %s8 = scalar_select 0, %s7, %s5
  $region1: #{sequence_merging_seq.1} parent=0
    #allocation4 [shape = 'u8[8192]{0}', space=vmem, size = 0x2000, scoped, tag = 'input window, operand 2']
    #allocation5 [shape = 's32[2]{0}', space=sflag, size = 0x8, scoped, tag = 'scoped memory for sequence_merging_seq.1']
    #allocation6 [shape = 's32[2]{0}', space=sflag, size = 0x8, scoped, tag = 'scoped memory for sequence_merging_seq.1']
    #allocation7 [shape = 'u8[8192]{0}', space=vmem, size = 0x2000, scoped, tag = 'input window, operand 3']
    #allocation8 [shape = 's32[2]{0}', space=sflag, size = 0x8, scoped, tag = 'scoped memory for sequence_merging_seq.1']
    #allocation9 [shape = 'u8[8192]{0}', space=vmem, size = 0x2000, scoped, tag = 'output window, operand 0']
    %9 = vsyncpa [#allocation5], 0
    %s10 = scalar_lea.sflag [#allocation5], 1
    %11 = vsyncpa %s10, 0
    %12 = vsyncpa [#allocation8], 0
    %s13 = scalar_lea.sflag [#allocation8], 1
    %14 = vsyncpa %s13, 0
    %15 = vsyncpa [#allocation6], 0
    %s16 = scalar_lea.sflag [#allocation6], 1
    %17 = vsyncpa %s16, 0
    loop: start=0, step=1, limit=4
    $region2: #{sequence_merging_seq.1} parent=1 // loop_pre_header
      _
    $region3: #{sequence_merging_seq.1} parent=1 // loop_header
      %s19 = sphi 0, %s23
      %p20 = scmp.ge.s32.totalorder %s19, 4
      %s26 = sphi 0, %s38
      %s27 = sphi 0, %s34
      %s28 = sphi 0, %s26
      %s29 = sphi 0, %s27
      %s30 = sphi 0, %s28
      %s31 = sphi 0, %s29
      %s39 = sphi 0, %s39
      %s41 = sphi 0, %s39
      %s42 = sphi 0, %s41
      %s56 = sphi 0, %s42
      %s64 = sphi 0, %s66
      %s67 = sphi 0, %s64
      %s68 = sphi 0, %s67
      %s84 = sphi 0, %s68
      %s92 = sphi 0, %s94
      %s95 = sphi 0, %s92
      %s96 = sphi 0, %s95
      %s112 = sphi 0, %s96
      %s120 = sphi 0, %s122
      %s123 = sphi 0, %s120
      %s124 = sphi 0, %s123
      %s140 = sphi 0, %s124
      %s148 = sphi 0, %s150
      %s151 = sphi 0, %s148
      %s152 = sphi 0, %s151
      %s168 = sphi 0, %s152
    $region4: #{sequence_merging_seq.1} parent=1 // loop_header_branch
      %22 = sbr.rel (%p20) target = $region8
    $region5: #{sequence_merging_seq.1} parent=1 // loop_body
      %s24 = ssub.s32 %s19, 1
      %s25 = ssub.s32 %s19, 2
      %s32 = sadd.s32 1, %s27
      %p33 = scmp.ge.s32.totalorder %s32, 1
      %s34 = scalar_select %p33, 0, %s32
      %s35 = sadd.s32 1, %s26
      %s36 = scalar_select %p33, %s35, %s26
      %p37 = scmp.ge.s32.totalorder %s36, 2
      %s38 = scalar_select %p37, 0, %s36
      %s40 = sadd.s32 %s39, 1
      %p43 = scmp.eq.s32.totalorder %s19, 1
      %p44 = scmp.ne.s32.totalorder %s39, %s41
      %p45 = scmp.eq.s32.totalorder %s19, 0
      %p46 = por %p44, %p45
      %p47 = scmp.ne.s32.totalorder %s39, %s41
      %p48 = scmp.eq.s32.totalorder %s24, 1
      %p49 = por %p47, %p48
      %p50 = scmp.ne.s32.totalorder %s41, %s42
      %p51 = scmp.eq.s32.totalorder %s24, 0
      %p52 = por %p50, %p51
      %p53 = scmp.ne.s32.totalorder %s41, %s42
      %p54 = scmp.eq.s32.totalorder %s25, 1
      %p55 = por %p53, %p54
      %p57 = scmp.ne.s32.totalorder %s42, %s56
      %p58 = scmp.eq.s32.totalorder %s25, 0
      %p59 = por %p57, %p58
      %s60 = ssub.s32 %s26, %s38
      %s61 = ssub.s32 %s27, %s34
      %s62 = sor.u32 %s60, %s61
      %p63 = scmp.eq.s32.totalorder %s62, 0
      %s65 = sadd.s32 %s64, 1
      %s66 = scalar_select %p63, %s64, %s65
      %p69 = pneg %p63
      %p70 = scmp.eq.s32.totalorder %s19, 1
      %p71 = por %p69, %p70
      %p72 = scmp.ne.s32.totalorder %s64, %s67
      %p73 = scmp.eq.s32.totalorder %s19, 0
      %p74 = por %p72, %p73
      %p75 = scmp.ne.s32.totalorder %s64, %s67
      %p76 = scmp.eq.s32.totalorder %s24, 1
      %p77 = por %p75, %p76
      %p78 = scmp.ne.s32.totalorder %s67, %s68
      %p79 = scmp.eq.s32.totalorder %s24, 0
      %p80 = por %p78, %p79
      %p81 = scmp.ne.s32.totalorder %s67, %s68
      %p82 = scmp.eq.s32.totalorder %s25, 1
      %p83 = por %p81, %p82
      %p85 = scmp.ne.s32.totalorder %s68, %s84
      %p86 = scmp.eq.s32.totalorder %s25, 0
      %p87 = por %p85, %p86
      %s88 = ssub.s32 %s26, %s38
      %s89 = ssub.s32 %s27, %s34
      %s90 = sor.u32 %s88, %s89
      %p91 = scmp.eq.s32.totalorder %s90, 0
      %s93 = sadd.s32 %s92, 1
      %s94 = scalar_select %p91, %s92, %s93
      %p97 = pneg %p91
      %p98 = scmp.eq.s32.totalorder %s19, 1
      %p99 = por %p97, %p98
      %p100 = scmp.ne.s32.totalorder %s92, %s95
      %p101 = scmp.eq.s32.totalorder %s19, 0
      %p102 = por %p100, %p101
      %p103 = scmp.ne.s32.totalorder %s92, %s95
      %p104 = scmp.eq.s32.totalorder %s24, 1
      %p105 = por %p103, %p104
      %p106 = scmp.ne.s32.totalorder %s95, %s96
      %p107 = scmp.eq.s32.totalorder %s24, 0
      %p108 = por %p106, %p107
      %p109 = scmp.ne.s32.totalorder %s95, %s96
      %p110 = scmp.eq.s32.totalorder %s25, 1
      %p111 = por %p109, %p110
      %p113 = scmp.ne.s32.totalorder %s96, %s112
      %p114 = scmp.eq.s32.totalorder %s25, 0
      %p115 = por %p113, %p114
      %s116 = ssub.s32 %s26, %s38
      %s117 = ssub.s32 %s27, %s34
      %s118 = sor.u32 %s116, %s117
      %p119 = scmp.eq.s32.totalorder %s118, 0
      %s121 = sadd.s32 %s120, 1
      %s122 = scalar_select %p119, %s120, %s121
      %p125 = pneg %p119
      %p126 = scmp.eq.s32.totalorder %s19, 1
      %p127 = por %p125, %p126
      %p128 = scmp.ne.s32.totalorder %s120, %s123
      %p129 = scmp.eq.s32.totalorder %s19, 0
      %p130 = por %p128, %p129
      %p131 = scmp.ne.s32.totalorder %s120, %s123
      %p132 = scmp.eq.s32.totalorder %s24, 1
      %p133 = por %p131, %p132
      %p134 = scmp.ne.s32.totalorder %s123, %s124
      %p135 = scmp.eq.s32.totalorder %s24, 0
      %p136 = por %p134, %p135
      %p137 = scmp.ne.s32.totalorder %s123, %s124
      %p138 = scmp.eq.s32.totalorder %s25, 1
      %p139 = por %p137, %p138
      %p141 = scmp.ne.s32.totalorder %s124, %s140
      %p142 = scmp.eq.s32.totalorder %s25, 0
      %p143 = por %p141, %p142
      %s144 = ssub.s32 %s26, %s38
      %s145 = ssub.s32 %s27, %s34
      %s146 = sor.u32 %s144, %s145
      %p147 = scmp.eq.s32.totalorder %s146, 0
      %s149 = sadd.s32 %s148, 1
      %s150 = scalar_select %p147, %s148, %s149
      %p153 = pneg %p147
      %p154 = scmp.eq.s32.totalorder %s19, 1
      %p155 = por %p153, %p154
      %p156 = scmp.ne.s32.totalorder %s148, %s151
      %p157 = scmp.eq.s32.totalorder %s19, 0
      %p158 = por %p156, %p157
      %p159 = scmp.ne.s32.totalorder %s148, %s151
      %p160 = scmp.eq.s32.totalorder %s24, 1
      %p161 = por %p159, %p160
      %p162 = scmp.ne.s32.totalorder %s151, %s152
      %p163 = scmp.eq.s32.totalorder %s24, 0
      %p164 = por %p162, %p163
      %p165 = scmp.ne.s32.totalorder %s151, %s152
      %p166 = scmp.eq.s32.totalorder %s25, 1
      %p167 = por %p165, %p166
      %p169 = scmp.ne.s32.totalorder %s152, %s168
      %p170 = scmp.eq.s32.totalorder %s25, 0
      %p171 = por %p169, %p170
      %p172 = scmp.le.s32.totalorder 1, %s19
      %p173 = scmp.lt.s32.totalorder %s19, 3
      %p174 = pnand %p172, %p173
      %p175 = pneg %p174
      // Predicated region
      $region9: #{sequence_merging_seq.1} parent=5 // pred_check
        _
      $region10: #{sequence_merging_seq.1} parent=5 // pred_check_branch
        %177 = sbr.rel (%p174) target = $region12
      $region11: #{sequence_merging_seq.1} parent=5 // pred_region
        %s178 = ssub.s32 %s19, 1
        // Predicated region
        $region13: #{sequence_merging_seq.1} parent=11 // pred_check
          %p179 = pneg %p52
        $region14: #{sequence_merging_seq.1} parent=11 // pred_check_branch
          %181 = sbr.rel (%p179) target = $region16
        $region15: #{sequence_merging_seq.1} parent=11 // pred_region
          _
        $region16: #{sequence_merging_seq.1} parent=11 // pred_fallthru
          _
      $region12: #{sequence_merging_seq.1} parent=5 // pred_fallthru
        _
      %p182 = scmp.lt.s32.totalorder %s19, 2
      // Predicated region
      $region17: #{sequence_merging_seq.1} parent=5 // pred_check
        %p183 = pneg %p182
      $region18: #{sequence_merging_seq.1} parent=5 // pred_check_branch
        %185 = sbr.rel (%p183) target = $region20
      $region19: #{sequence_merging_seq.1} parent=5 // pred_region
        // Predicated region
        $region21: #{sequence_merging_seq.1} parent=19 // pred_check
          %p186 = pneg %p74
        $region22: #{sequence_merging_seq.1} parent=19 // pred_check_branch
          %188 = sbr.rel (%p186) target = $region24
        $region23: #{sequence_merging_seq.1} parent=19 // pred_region
          %p189 = scmp.lt.s32.totalorder %s26, 1
          %s190 = scalar_select %p189, %s26, 1
          %p191 = scmp.lt.s32.totalorder %s27, 0
          %s192 = scalar_select %p191, %s27, 0
          %s193 = sadd.s32 %s192, %s190
          %s194 = smul.addr %s193, 8
          %s195 = scalar_lea.vmem %s1, %s194
        $region24: #{sequence_merging_seq.1} parent=19 // pred_fallthru
          _
        // Predicated region
        $region25: #{sequence_merging_seq.1} parent=19 // pred_check
          %p196 = pneg %p102
        $region26: #{sequence_merging_seq.1} parent=19 // pred_check_branch
          %198 = sbr.rel (%p196) target = $region28
        $region27: #{sequence_merging_seq.1} parent=19 // pred_region
          %s199 = sand.u32 %s92, 1
          %s200 = scalar_lea.sflag [#allocation5], %s199
          %s201 = sand.u32 %s92, 1
          %s202 = smul.addr %s201, 8
          %s203 = scalar_lea.vmem [#allocation4], %s202
          %s205 = ssub.s32 128, 128
          %206 = vsyncadd %s200, %s205
          %s207 = sadd.s32 %s27, %s26
          %s208 = smul.addr %s207, 128
          %s209 = scalar_lea.hbm %s2, %s208
          %s211 = sshll.u32 %s203, 4
          %s212 = int_to_ptr.vmem [resolvable:$true] %s211
          %214 = dma.hbm_to_vmem [thread:$0]  %s209, 128, %s212, %s200
        $region28: #{sequence_merging_seq.1} parent=19 // pred_fallthru
          _
        // Predicated region
        $region29: #{sequence_merging_seq.1} parent=19 // pred_check
          %p215 = pneg %p130
        $region30: #{sequence_merging_seq.1} parent=19 // pred_check_branch
          %217 = sbr.rel (%p215) target = $region32
        $region31: #{sequence_merging_seq.1} parent=19 // pred_region
          %s218 = sand.u32 %s120, 1
          %s219 = scalar_lea.sflag [#allocation8], %s218
          %s220 = sand.u32 %s120, 1
          %s221 = smul.addr %s220, 8
          %s222 = scalar_lea.vmem [#allocation7], %s221
          %s224 = ssub.s32 128, 128
          %225 = vsyncadd %s219, %s224
          %s226 = sadd.s32 %s27, %s26
          %s227 = smul.addr %s226, 128
          %s228 = scalar_lea.hbm %s3, %s227
          %s230 = sshll.u32 %s222, 4
          %s231 = int_to_ptr.vmem [resolvable:$true] %s230
          %233 = dma.hbm_to_vmem [thread:$0]  %s228, 128, %s231, %s219
        $region32: #{sequence_merging_seq.1} parent=19 // pred_fallthru
          _
      $region20: #{sequence_merging_seq.1} parent=5 // pred_fallthru
        _
      %p234 = scmp.le.s32.totalorder 1, %s19
      %p235 = scmp.lt.s32.totalorder %s19, 3
      %p236 = pnand %p234, %p235
      %p237 = pneg %p236
      // Predicated region
      $region33: #{sequence_merging_seq.1} parent=5 // pred_check
        _
      $region34: #{sequence_merging_seq.1} parent=5 // pred_check_branch
        %239 = sbr.rel (%p236) target = $region36
      $region35: #{sequence_merging_seq.1} parent=5 // pred_region
        %s240 = ssub.s32 %s19, 1
        %s241 = sand.u32 %s95, 1
        %s242 = scalar_lea.sflag [#allocation5], %s241
        %s243 = sand.u32 %s95, 1
        %s244 = smul.addr %s243, 8
        %s245 = scalar_lea.vmem [#allocation4], %s244
        // Predicated region
        $region37: #{sequence_merging_seq.1} parent=35 // pred_check
          %p246 = pneg %p108
        $region38: #{sequence_merging_seq.1} parent=35 // pred_check_branch
          %248 = sbr.rel (%p246) target = $region40
        $region39: #{sequence_merging_seq.1} parent=35 // pred_region
          %249 = dma.done %s242, 128
        $region40: #{sequence_merging_seq.1} parent=35 // pred_fallthru
          _
        %s250 = sand.u32 %s123, 1
        %s251 = scalar_lea.sflag [#allocation8], %s250
        %s252 = sand.u32 %s123, 1
        %s253 = smul.addr %s252, 8
        %s254 = scalar_lea.vmem [#allocation7], %s253
        // Predicated region
        $region41: #{sequence_merging_seq.1} parent=35 // pred_check
          %p255 = pneg %p136
        $region42: #{sequence_merging_seq.1} parent=35 // pred_check_branch
          %257 = sbr.rel (%p255) target = $region44
        $region43: #{sequence_merging_seq.1} parent=35 // pred_region
          %258 = dma.done %s251, 128
        $region44: #{sequence_merging_seq.1} parent=35 // pred_fallthru
          _
        %p259 = pneg %p52
        %p260 = pneg %p49
        %p261 = scmp.lt.s32.totalorder %s28, 1
        %s262 = scalar_select %p261, %s28, 1
        %p263 = scmp.lt.s32.totalorder %s29, 0
        %s264 = scalar_select %p263, %s29, 0
        %s265 = sadd.s32 %s264, %s262
        %s266 = smul.addr %s265, 8
        %s267 = scalar_lea.vmem %s1, %s266
        %p268 = pneg %p80
        %p269 = pneg %p77
        %s270 = sand.u32 %s95, 1
        %s271 = scalar_lea.sflag [#allocation5], %s270
        %s272 = sand.u32 %s95, 1
        %s273 = smul.addr %s272, 8
        %s274 = scalar_lea.vmem [#allocation4], %s273
        %p275 = pneg %p108
        %p276 = pneg %p105
        %s277 = sand.u32 %s123, 1
        %s278 = scalar_lea.sflag [#allocation8], %s277
        %s279 = sand.u32 %s123, 1
        %s280 = smul.addr %s279, 8
        %s281 = scalar_lea.vmem [#allocation7], %s280
        %p282 = pneg %p136
        %p283 = pneg %p133
        %p284 = pneg %p164
        %p285 = pneg %p161
        %s286 = sand.u32 %s151, 1
        %s287 = scalar_lea.sflag [#allocation6], %s286
        %s288 = sand.u32 %s151, 1
        %s289 = smul.addr %s288, 8
        %s290 = scalar_lea.vmem [#allocation9], %s289
        %p291 = scmp.lt.s32.totalorder %s28, 1
        %s292 = scalar_select %p291, %s28, 1
        %p293 = scmp.lt.s32.totalorder %s29, 0
        %s294 = scalar_select %p293, %s29, 0
        %s295 = sadd.s32 %s294, %s292
        %s296 = smul.addr %s295, 8
        %s297 = scalar_lea.vmem %s1, %s296
        %p298 = scmp.eq.s32.totalorder %s29, 0
        // Predicated region
        $region45: #{sequence_merging_seq.1} parent=35 // pred_check
          %p299 = pneg %p298
        $region46: #{sequence_merging_seq.1} parent=35 // pred_check_branch
          %301 = sbr.rel (%p299) target = $region48
        $region47: #{sequence_merging_seq.1} parent=35 // pred_region
          %vm302 = vcmask 0
          %303 = vst.msk [vmem:[#allocation2] sm:$0x1] %vm302, 0.0
          %vm304 = vcmask 647168
          %305 = vst.msk [vmem:[#allocation3] sm:$0x1] %vm304, 0.0
        $region48: #{sequence_merging_seq.1} parent=35 // pred_fallthru
          _
        %v306 = vld [vmem:[%s0] sm:$0xf]
        %v307 = vld [vmem:[%s297] sm:$0xff]
        %v308 = vld [vmem:[%s245] sm:$0xff]
        %v309 = vld [vmem:[%s254] sm:$0xff]
        %v310 = vmul.f32 %v307, 1.442695
        %v311 = vpow.pop %v310
        %v312 = vmul.f32 %v311, %v308
        %vm313 = vcmask 654336
        %v314 = vsel %vm313, %v311, 0.0
        %315 = vadd.xlane.f32.xlu0 %v314
        %v316 = vpop.xlane.xlu0 %315
        %v317 = vlaneseq
        %v318 = vshrl.u32 %v317, 7
        %v319 = vsub.s32 0, %v318
        %v320 = vrot.slane %v306, %v319
        %v321 = vmul.f32 %v309, %v320
        %v322 = vsel %vm313, %v321, 0.0
        %323 = vadd.xlane.f32.xlu0 %v322
        %v324 = vpop.xlane.xlu0 %323
        %v325 = vlaneseq
        %v326 = vshrl.u32 %v325, 7
        %v327 = vsub.s32 3, %v326
        %v328 = vrot.slane %v306, %v327
        %v329 = vadd.f32 %v324, %v328
        %v330 = vmin.f32 %v329, 0.0
        %v331 = vand.u32 2147483647, %v329
        %v332 = vsub.f32 0.0, %v331
        %v333 = vmul.f32 %v332, 1.442695
        %v334 = vpow.pop %v333
        %v335 = vadd.f32 %v334, 1.0
        %v336 = vlog2.pop %v335
        %v337 = vmul.f32 %v336, 0.6931472
        %v338 = vsub.f32 %v330, %v337
        %v339 = vlaneseq
        %v340 = vshrl.u32 %v339, 7
        %v341 = vlaneseq
        %v342 = vand.u32 %v341, 127
        %vm343 = vcmp.le.s32.totalorder %v342, %v340
        %v344 = vsel %vm343, 1, 0
        %v345 = vcvt.s32.f32 %v344
        %vm346 = vcmp.gt.s32.totalorder %v340, %v342
        %v347 = vsel %vm346, 1, 0
        %v348 = vcvt.s32.f32 %v347
        %350 = vset.pattern.permute.xlu0 0
        %351 = vperm.xlu0 %350, %v338
        %v352 = vpop.permute.xlu0 %351
        %v354 = vmul.f32 %v352, %v348
        %vm355 = vcmask 64512
        %v357 = vsel %vm355, %v345, 0
        %359 = vmatprep.subr.mxu0 0.0
        %360 = vmatpush1.msra.mxu0 0.0
        %361 = vmatprep.subr.mxu0 0.0
        %362 = vmatpush1.msra.mxu0 0.0
        %363 = vmatprep.subr.mxu0 0.0
        %364 = vmatpush1.msra.mxu0 0.0
        %365 = vmatprep.subr.mxu0 0.0
        %366 = vmatpush1.msra.mxu0 0.0
        %367 = vmatprep.subr.mxu0 0.0
        %368 = vmatpush1.msra.mxu0 0.0
        %369 = vmatprep.subr.mxu0 0.0
        %370 = vmatpush1.msra.mxu0 0.0
        %371 = vmatprep.subr.mxu0 0.0
        %372 = vmatpush1.msra.mxu0 0.0
        %373 = vmatprep.subr.mxu0 0.0
        %374 = vmatpush1.msra.mxu0 0.0
        %375 = vmatprep.subr.mxu0 0.0
        %376 = vmatpush1.msra.mxu0 0.0
        %377 = vmatprep.subr.mxu0 0.0
        %378 = vmatpush1.msra.mxu0 0.0
        %379 = vmatprep.subr.mxu0 0.0
        %380 = vmatpush1.msra.mxu0 0.0
        %381 = vmatprep.subr.mxu0 0.0
        %382 = vmatpush1.msra.mxu0 0.0
        %383 = vmatprep.subr.mxu0 0.0
        %384 = vmatpush1.msra.mxu0 0.0
        %385 = vmatprep.subr.mxu0 0.0
        %386 = vmatpush1.msra.mxu0 0.0
        %387 = vmatprep.subr.mxu0 0.0
        %388 = vmatpush1.msra.mxu0 0.0
        %389 = vmatprep.subr.mxu0 0.0
        %390 = vmatpush1.msra.mxu0 %v354
        %391 = vmatprep.subr.mxu0 0.0
        %392 = vmatpush2.msra.mxu0 0.0
        %393 = vmatprep.subr.mxu0 0.0
        %394 = vmatpush2.msra.mxu0 0.0
        %395 = vmatprep.subr.mxu0 0.0
        %396 = vmatpush2.msra.mxu0 0.0
        %397 = vmatprep.subr.mxu0 0.0
        %398 = vmatpush2.msra.mxu0 0.0
        %399 = vmatprep.subr.mxu0 0.0
        %400 = vmatpush2.msra.mxu0 0.0
        %401 = vmatprep.subr.mxu0 0.0
        %402 = vmatpush2.msra.mxu0 0.0
        %403 = vmatprep.subr.mxu0 0.0
        %404 = vmatpush2.msra.mxu0 0.0
        %405 = vmatprep.subr.mxu0 0.0
        %406 = vmatpush2.msra.mxu0 0.0
        %407 = vmatprep.subr.mxu0 0.0
        %408 = vmatpush2.msra.mxu0 0.0
        %409 = vmatprep.subr.mxu0 0.0
        %410 = vmatpush2.msra.mxu0 0.0
        %411 = vmatprep.subr.mxu0 0.0
        %412 = vmatpush2.msra.mxu0 0.0
        %413 = vmatprep.subr.mxu0 0.0
        %414 = vmatpush2.msra.mxu0 0.0
        %415 = vmatprep.subr.mxu0 0.0
        %416 = vmatpush2.msra.mxu0 0.0
        %417 = vmatprep.subr.mxu0 0.0
        %418 = vmatpush2.msra.mxu0 0.0
        %419 = vmatprep.subr.mxu0 0.0
        %420 = vmatpush2.msra.mxu0 0.0
        %421 = vmatprep.subr.mxu0 0.0
        %422 = vmatpush2.msra.mxu0 0.0
        %423 = vmatprep.mubr.f32.mxu0 0.0
        %424 = vmatmul.mubr.f32.gmra.mxu0 %v357
        %v425 = vpop.f32.mrf.mxu0
        %v426 = vadd.f32 0.0, %v425
        %v427 = vpop.f32.mrf.mxu0
        %428 = vdwg.mxu0
        %429 = vmatprep.subr.mxu0 0.0
        %430 = vmatpush1.msra.mxu0 0.0
        %431 = vmatprep.subr.mxu0 0.0
        %432 = vmatpush1.msra.mxu0 0.0
        %433 = vmatprep.subr.mxu0 0.0
        %434 = vmatpush1.msra.mxu0 0.0
        %435 = vmatprep.subr.mxu0 0.0
        %436 = vmatpush1.msra.mxu0 0.0
        %437 = vmatprep.subr.mxu0 0.0
        %438 = vmatpush1.msra.mxu0 0.0
        %439 = vmatprep.subr.mxu0 0.0
        %440 = vmatpush1.msra.mxu0 0.0
        %441 = vmatprep.subr.mxu0 0.0
        %442 = vmatpush1.msra.mxu0 0.0
        %443 = vmatprep.subr.mxu0 0.0
        %444 = vmatpush1.msra.mxu0 0.0
        %445 = vmatprep.subr.mxu0 0.0
        %446 = vmatpush1.msra.mxu0 0.0
        %447 = vmatprep.subr.mxu0 0.0
        %448 = vmatpush1.msra.mxu0 0.0
        %449 = vmatprep.subr.mxu0 0.0
        %450 = vmatpush1.msra.mxu0 0.0
        %451 = vmatprep.subr.mxu0 0.0
        %452 = vmatpush1.msra.mxu0 0.0
        %453 = vmatprep.subr.mxu0 0.0
        %454 = vmatpush1.msra.mxu0 0.0
        %455 = vmatprep.subr.mxu0 0.0
        %456 = vmatpush1.msra.mxu0 0.0
        %457 = vmatprep.subr.mxu0 0.0
        %458 = vmatpush1.msra.mxu0 0.0
        %459 = vmatprep.subr.mxu0 0.0
        %460 = vmatpush1.msra.mxu0 %v338
        %461 = vmatprep.subr.mxu0 0.0
        %462 = vmatpush2.msra.mxu0 0.0
        %463 = vmatprep.subr.mxu0 0.0
        %464 = vmatpush2.msra.mxu0 0.0
        %465 = vmatprep.subr.mxu0 0.0
        %466 = vmatpush2.msra.mxu0 0.0
        %467 = vmatprep.subr.mxu0 0.0
        %468 = vmatpush2.msra.mxu0 0.0
        %469 = vmatprep.subr.mxu0 0.0
        %470 = vmatpush2.msra.mxu0 0.0
        %471 = vmatprep.subr.mxu0 0.0
        %472 = vmatpush2.msra.mxu0 0.0
        %473 = vmatprep.subr.mxu0 0.0
        %474 = vmatpush2.msra.mxu0 0.0
        %475 = vmatprep.subr.mxu0 0.0
        %476 = vmatpush2.msra.mxu0 0.0
        %477 = vmatprep.subr.mxu0 0.0
        %478 = vmatpush2.msra.mxu0 0.0
        %479 = vmatprep.subr.mxu0 0.0
        %480 = vmatpush2.msra.mxu0 0.0
        %481 = vmatprep.subr.mxu0 0.0
        %482 = vmatpush2.msra.mxu0 0.0
        %483 = vmatprep.subr.mxu0 0.0
        %484 = vmatpush2.msra.mxu0 0.0
        %485 = vmatprep.subr.mxu0 0.0
        %486 = vmatpush2.msra.mxu0 0.0
        %487 = vmatprep.subr.mxu0 0.0
        %488 = vmatpush2.msra.mxu0 0.0
        %489 = vmatprep.subr.mxu0 0.0
        %490 = vmatpush2.msra.mxu0 0.0
        %491 = vmatprep.subr.mxu0 0.0
        %492 = vmatpush2.msra.mxu0 0.0
        %493 = vmatprep.mubr.f32.mxu0 0.0
        %494 = vmatmul.mubr.f32.gmra.mxu0 %v357
        %v495 = vpop.f32.mrf.mxu0
        %v496 = vadd.f32 0.0, %v495
        %v497 = vpop.f32.mrf.mxu0
        %498 = vdwg.mxu0
        %v499 = vmul.f32 %v426, 1.442695
        %v500 = vpow.pop %v499
        %v501 = vmul.f32 %v500, %v345
        %v502 = vmul.f32 %v496, 1.442695
        %v503 = vpow.pop %v502
        %v504 = vld [vmem:[#allocation3] sm:$0x1]
        %506 = vset.pattern.permute.xlu0 0
        %507 = vperm.xlu0 %506, %v503
        %v508 = vpop.permute.xlu0 %507
        %v511 = vlaneseq
        %v512 = vshrl.u32 %v511, 7
        %v513 = vsub.s32 0, %v512
        %v514 = vrot.slane %v504, %v513
        %v516 = vmul.f32 %v508, %v514
        %v518 = vsel %vm355, %v501, 0
        %520 = vmatprep.subr.mxu0 0.0
        %521 = vmatpush1.msra.mxu0 0.0
        %522 = vmatprep.subr.mxu0 0.0
        %523 = vmatpush1.msra.mxu0 0.0
        %524 = vmatprep.subr.mxu0 0.0
        %525 = vmatpush1.msra.mxu0 0.0
        %526 = vmatprep.subr.mxu0 0.0
        %527 = vmatpush1.msra.mxu0 0.0
        %528 = vmatprep.subr.mxu0 0.0
        %529 = vmatpush1.msra.mxu0 0.0
        %530 = vmatprep.subr.mxu0 0.0
        %531 = vmatpush1.msra.mxu0 0.0
        %532 = vmatprep.subr.mxu0 0.0
        %533 = vmatpush1.msra.mxu0 0.0
        %534 = vmatprep.subr.mxu0 0.0
        %535 = vmatpush1.msra.mxu0 0.0
        %536 = vmatprep.subr.mxu0 0.0
        %537 = vmatpush1.msra.mxu0 0.0
        %538 = vmatprep.subr.mxu0 0.0
        %539 = vmatpush1.msra.mxu0 0.0
        %540 = vmatprep.subr.mxu0 0.0
        %541 = vmatpush1.msra.mxu0 0.0
        %542 = vmatprep.subr.mxu0 0.0
        %543 = vmatpush1.msra.mxu0 0.0
        %544 = vmatprep.subr.mxu0 0.0
        %545 = vmatpush1.msra.mxu0 0.0
        %546 = vmatprep.subr.mxu0 0.0
        %547 = vmatpush1.msra.mxu0 0.0
        %548 = vmatprep.subr.mxu0 0.0
        %549 = vmatpush1.msra.mxu0 0.0
        %550 = vmatprep.subr.mxu0 0.0
        %551 = vmatpush1.msra.mxu0 %v312
        %552 = vmatprep.subr.mxu0 0.0
        %553 = vmatpush2.msra.mxu0 0.0
        %554 = vmatprep.subr.mxu0 0.0
        %555 = vmatpush2.msra.mxu0 0.0
        %556 = vmatprep.subr.mxu0 0.0
        %557 = vmatpush2.msra.mxu0 0.0
        %558 = vmatprep.subr.mxu0 0.0
        %559 = vmatpush2.msra.mxu0 0.0
        %560 = vmatprep.subr.mxu0 0.0
        %561 = vmatpush2.msra.mxu0 0.0
        %562 = vmatprep.subr.mxu0 0.0
        %563 = vmatpush2.msra.mxu0 0.0
        %564 = vmatprep.subr.mxu0 0.0
        %565 = vmatpush2.msra.mxu0 0.0
        %566 = vmatprep.subr.mxu0 0.0
        %567 = vmatpush2.msra.mxu0 0.0
        %568 = vmatprep.subr.mxu0 0.0
        %569 = vmatpush2.msra.mxu0 0.0
        %570 = vmatprep.subr.mxu0 0.0
        %571 = vmatpush2.msra.mxu0 0.0
        %572 = vmatprep.subr.mxu0 0.0
        %573 = vmatpush2.msra.mxu0 0.0
        %574 = vmatprep.subr.mxu0 0.0
        %575 = vmatpush2.msra.mxu0 0.0
        %576 = vmatprep.subr.mxu0 0.0
        %577 = vmatpush2.msra.mxu0 0.0
        %578 = vmatprep.subr.mxu0 0.0
        %579 = vmatpush2.msra.mxu0 0.0
        %580 = vmatprep.subr.mxu0 0.0
        %581 = vmatpush2.msra.mxu0 0.0
        %582 = vmatprep.subr.mxu0 0.0
        %583 = vmatpush2.msra.mxu0 0.0
        %584 = vmatprep.mubr.f32.mxu0 0.0
        %585 = vmatmul.mubr.f32.gmra.mxu0 %v518
        %v586 = vpop.f32.mrf.mxu0
        %v587 = vadd.f32 %v516, %v586
        %v588 = vpop.f32.mrf.mxu0
        %589 = vdwg.mxu0
        %v590 = vld [vmem:[#allocation2] sm:$0x1]
        %v592 = vlaneseq
        %v593 = vshrl.u32 %v592, 7
        %v594 = vsub.s32 0, %v593
        %v595 = vrot.slane %v590, %v594
        %v597 = vmul.f32 %v503, %v595
        %598 = vmatprep.subr.mxu0 0.0
        %599 = vmatpush1.msra.mxu0 0.0
        %600 = vmatprep.subr.mxu0 0.0
        %601 = vmatpush1.msra.mxu0 0.0
        %602 = vmatprep.subr.mxu0 0.0
        %603 = vmatpush1.msra.mxu0 0.0
        %604 = vmatprep.subr.mxu0 0.0
        %605 = vmatpush1.msra.mxu0 0.0
        %606 = vmatprep.subr.mxu0 0.0
        %607 = vmatpush1.msra.mxu0 0.0
        %608 = vmatprep.subr.mxu0 0.0
        %609 = vmatpush1.msra.mxu0 0.0
        %610 = vmatprep.subr.mxu0 0.0
        %611 = vmatpush1.msra.mxu0 0.0
        %612 = vmatprep.subr.mxu0 0.0
        %613 = vmatpush1.msra.mxu0 0.0
        %614 = vmatprep.subr.mxu0 0.0
        %615 = vmatpush1.msra.mxu0 0.0
        %616 = vmatprep.subr.mxu0 0.0
        %617 = vmatpush1.msra.mxu0 0.0
        %618 = vmatprep.subr.mxu0 0.0
        %619 = vmatpush1.msra.mxu0 0.0
        %620 = vmatprep.subr.mxu0 0.0
        %621 = vmatpush1.msra.mxu0 0.0
        %622 = vmatprep.subr.mxu0 0.0
        %623 = vmatpush1.msra.mxu0 0.0
        %624 = vmatprep.subr.mxu0 0.0
        %625 = vmatpush1.msra.mxu0 0.0
        %626 = vmatprep.subr.mxu0 0.0
        %627 = vmatpush1.msra.mxu0 0.0
        %628 = vmatprep.subr.mxu0 0.0
        %629 = vmatpush1.msra.mxu0 %v316
        %630 = vmatprep.subr.mxu0 0.0
        %631 = vmatpush2.msra.mxu0 0.0
        %632 = vmatprep.subr.mxu0 0.0
        %633 = vmatpush2.msra.mxu0 0.0
        %634 = vmatprep.subr.mxu0 0.0
        %635 = vmatpush2.msra.mxu0 0.0
        %636 = vmatprep.subr.mxu0 0.0
        %637 = vmatpush2.msra.mxu0 0.0
        %638 = vmatprep.subr.mxu0 0.0
        %639 = vmatpush2.msra.mxu0 0.0
        %640 = vmatprep.subr.mxu0 0.0
        %641 = vmatpush2.msra.mxu0 0.0
        %642 = vmatprep.subr.mxu0 0.0
        %643 = vmatpush2.msra.mxu0 0.0
        %644 = vmatprep.subr.mxu0 0.0
        %645 = vmatpush2.msra.mxu0 0.0
        %646 = vmatprep.subr.mxu0 0.0
        %647 = vmatpush2.msra.mxu0 0.0
        %648 = vmatprep.subr.mxu0 0.0
        %649 = vmatpush2.msra.mxu0 0.0
        %650 = vmatprep.subr.mxu0 0.0
        %651 = vmatpush2.msra.mxu0 0.0
        %652 = vmatprep.subr.mxu0 0.0
        %653 = vmatpush2.msra.mxu0 0.0
        %654 = vmatprep.subr.mxu0 0.0
        %655 = vmatpush2.msra.mxu0 0.0
        %656 = vmatprep.subr.mxu0 0.0
        %657 = vmatpush2.msra.mxu0 0.0
        %658 = vmatprep.subr.mxu0 0.0
        %659 = vmatpush2.msra.mxu0 0.0
        %660 = vmatprep.subr.mxu0 0.0
        %661 = vmatpush2.msra.mxu0 0.0
        %662 = vmatprep.mubr.f32.mxu0 0.0
        %663 = vmatmul.mubr.f32.gmra.mxu0 %v518
        %v664 = vpop.f32.mrf.mxu0
        %v665 = vadd.f32 %v597, %v664
        %v666 = vpop.f32.mrf.mxu0
        %667 = vdwg.mxu0
        %vm668 = vcmask 654343
        %669 = vst.msk [vmem:[#allocation3 - $0x7] sm:$0x80] %vm668, %v587
        %vm670 = vcmask 7175
        %671 = vst.msk [vmem:[#allocation2 - $0x7] sm:$0x80] %vm670, %v665
        %v672 = vadd.f32 %v665, 1e-08
        %674 = vset.pattern.permute.xlu0 0
        %675 = vperm.xlu0 %674, %v672
        %v676 = vpop.permute.xlu0 %675
        %v678 = vrcp.pop %v676
        %v679 = vmul.f32 %v587, %v678
        %v680 = vsel %vm313, %v679, 0.0
        %681 = vadd.xlane.f32.xlu0 %v680
        %v682 = vpop.xlane.xlu0 %681
        %v683 = vrcp.pop 80.0
        %v684 = vmul.f32 %v682, %v683
        %v685 = vsub.f32 %v679, %v684
        %v686 = vmul.f32 %v685, %v685
        %v687 = vsel %vm313, %v686, 0.0
        %688 = vadd.xlane.f32.xlu0 %v687
        %v689 = vpop.xlane.xlu0 %688
        %v690 = vmul.f32 %v689, %v683
        %v691 = vadd.f32 %v690, 1e-05
        %v692 = vrsqrt.pop %v691
        %v693 = vmul.f32 %v685, %v692
        %v694 = vlaneseq
        %v695 = vshrl.u32 %v694, 7
        %v696 = vsub.s32 1, %v695
        %v697 = vrot.slane %v306, %v696
        %v698 = vmul.f32 %v693, %v697
        %v699 = vlaneseq
        %v700 = vshrl.u32 %v699, 7
        %v701 = vsub.s32 2, %v700
        %v702 = vrot.slane %v306, %v701
        %v703 = vadd.f32 %v698, %v702
        %704 = vst.msk [vmem:[%s290] sm:$0xff] %vm313, %v703
        %s705 = sand.u32 %s151, 1
        %s706 = scalar_lea.sflag [#allocation6], %s705
        %s707 = sand.u32 %s151, 1
        %s708 = smul.addr %s707, 8
        %s709 = scalar_lea.vmem [#allocation9], %s708
        // Predicated region
        $region49: #{sequence_merging_seq.1} parent=35 // pred_check
          %p710 = pneg %p161
        $region50: #{sequence_merging_seq.1} parent=35 // pred_check_branch
          %712 = sbr.rel (%p710) target = $region52
        $region51: #{sequence_merging_seq.1} parent=35 // pred_region
          %s714 = ssub.s32 128, 128
          %715 = vsyncadd %s706, %s714
          %s716 = sadd.s32 %s29, %s28
          %s717 = smul.addr %s716, 128
          %s718 = scalar_lea.hbm %s4, %s717
          %s720 = sshll.u32 %s709, 4
          %s721 = int_to_ptr.vmem [resolvable:$true] %s720
          %723 = dma.vmem_to_hbm [thread:$0]  %s721, 128, %s718, %s706
        $region52: #{sequence_merging_seq.1} parent=35 // pred_fallthru
          _
      $region36: #{sequence_merging_seq.1} parent=5 // pred_fallthru
        _
      %p724 = scmp.le.s32.totalorder 2, %s19
      // Predicated region
      $region53: #{sequence_merging_seq.1} parent=5 // pred_check
        %p725 = pneg %p724
      $region54: #{sequence_merging_seq.1} parent=5 // pred_check_branch
        %727 = sbr.rel (%p725) target = $region56
      $region55: #{sequence_merging_seq.1} parent=5 // pred_region
        %s728 = ssub.s32 %s19, 2
        // Predicated region
        $region57: #{sequence_merging_seq.1} parent=55 // pred_check
          %p729 = pneg %p167
        $region58: #{sequence_merging_seq.1} parent=55 // pred_check_branch
          %731 = sbr.rel (%p729) target = $region60
        $region59: #{sequence_merging_seq.1} parent=55 // pred_region
          %s732 = sand.u32 %s152, 1
          %s733 = scalar_lea.sflag [#allocation6], %s732
          %s734 = sand.u32 %s152, 1
          %s735 = smul.addr %s734, 8
          %s736 = scalar_lea.vmem [#allocation9], %s735
          %737 = dma.done %s733, 128
        $region60: #{sequence_merging_seq.1} parent=55 // pred_fallthru
          _
      $region56: #{sequence_merging_seq.1} parent=5 // pred_fallthru
        _
    $region6: #{sequence_merging_seq.1} parent=1 // loop_footer
      %s23 = sadd.s32 1, %s19
    $region7: #{sequence_merging_seq.1} parent=1 // loop_footer_branch
      %18 = sbr.rel target = $region3
    $region8: #{sequence_merging_seq.1} parent=1 // loop_exit
      _
    %738 = vsyncpa [#allocation5], 1
    %s739 = scalar_lea.sflag [#allocation5], 1
    %740 = vsyncpa %s739, 1
    %741 = vsyncpa [#allocation8], 1
    %s742 = scalar_lea.sflag [#allocation8], 1
    %743 = vsyncpa %s742, 1
    %744 = vsyncpa [#allocation6], 1
    %s745 = scalar_lea.sflag [#allocation6], 1
    %746 = vsyncpa %s745, 1

</llo_original>
